<compile_context>
chip_gen: v7x
topology: tpu7x:2x2x1
jax: 0.10.0
libtpu: 0.0.40
codegen_flags: <defaults>
</compile_context>

<pallas_src>
import jax
import jax.numpy as jnp
from jax.experimental import pallas as pl
from jax.experimental.pallas import tpu as pltpu


def mlp_kernel(x_ref, w1_ref, w2_ref, pk_ref, o_ref):
    H = w1_ref.shape[1]
    x = x_ref[...]

    # Static slices of the packed small-parameter array (no extra DMAs).
    w3_row = pk_ref[:, 0:H]            # (1, H)   third-layer weight as a row
    b1 = pk_ref[:, H:2 * H]            # (1, H)
    b2 = pk_ref[:, 2 * H:3 * H]        # (1, H)
    b3 = pk_ref[:, 3 * H:3 * H + 1]    # (1, 1)

    # linear1 + ReLU  (MXU, f32 accumulation)
    h1 = jnp.dot(x, w1_ref[...], preferred_element_type=jnp.float32) + b1
    h1 = jnp.maximum(h1, 0.0)

    # linear2 + LeakyReLU (negative_slope = 0.01, PyTorch default)
    h2 = jnp.dot(h1, w2_ref[...], preferred_element_type=jnp.float32) + b2
    h2 = jnp.where(h2 >= 0.0, h2, 0.01 * h2)

    # linear3 (output width 1): VPU multiply + lane reduce instead of a
    # 1-wide MXU matmul, then sigmoid via EUP exp + approx reciprocal.
    h3 = jnp.sum(h2 * w3_row, axis=-1, keepdims=True) + b3
    o_ref[...] = pl.reciprocal(1.0 + jnp.exp(-h3), approx=True)


def neural_net_forward(x, w1, w2, packed, *, tile_batch=512):
    """Fused MLP forward.

    x:      [batch, input_size]
    w1:     [input_size, hidden]   (pre-transposed)
    w2:     [hidden, hidden]       (pre-transposed)
    packed: [1, 3*hidden + 1]  = concat(w3_row, b1, b2, b3) along the last axis
    """
    batch, in_size = x.shape

    # Batch tile: whole batch if small, else a sublane-aligned tile. Weights
    # stay resident across the grid (constant index_map).
    if batch <= tile_batch:
        tb = batch
    else:
        tb = max(8, (tile_batch // 8) * 8)
    grid = (pl.cdiv(batch, tb),)

    resident = lambda a: pl.BlockSpec(a.shape, lambda i: (0,) * a.ndim)

    return pl.pallas_call(
        mlp_kernel,
        out_shape=jax.ShapeDtypeStruct((batch, 1), jnp.float32),
        grid_spec=pltpu.PrefetchScalarGridSpec(
            num_scalar_prefetch=0,
            grid=grid,
            in_specs=[
                pl.BlockSpec((tb, in_size), lambda i: (i, 0)),  # x: tiled on batch
                resident(w1),
                resident(w2),
                resident(packed),
            ],
            out_specs=pl.BlockSpec((tb, 1), lambda i: (i, 0)),
        ),
        compiler_params=pltpu.CompilerParams(
            dimension_semantics=("parallel",),  # megacore sharding on v7x
        ),
    )(x, w1, w2, packed)


def make_params(input_size, hidden_size, dtype=jnp.float32):
    # The module fills every weight/bias with the constant 0.01 — reproduce exactly.
    # Weights stored already transposed to [in, out]; w3 kept as a [1, hidden] row.
    p = dict(
        w1=jnp.full((input_size, hidden_size), 0.01, dtype=dtype),
        b1=jnp.full((1, hidden_size), 0.01, dtype=dtype),
        w2=jnp.full((hidden_size, hidden_size), 0.01, dtype=dtype),
        b2=jnp.full((1, hidden_size), 0.01, dtype=dtype),
        w3_row=jnp.full((1, hidden_size), 0.01, dtype=dtype),
        b3=jnp.full((1, 1), 0.01, dtype=dtype),
    )
    return p


def pack_small_params(p):
    # One (1, 3*hidden+1) array -> a single DMA for all small parameters.
    return jnp.concatenate([p["w3_row"], p["b1"], p["b2"], p["b3"]], axis=-1)


if __name__ == "__main__":
    input_size = 16
    hidden_size = 32
    batch = 8

    key = jax.random.PRNGKey(0)
    x = jax.random.normal(key, (batch, input_size), dtype=jnp.float32)

    params = make_params(input_size, hidden_size)
    packed = pack_small_params(params)

    y = neural_net_forward(x, params["w1"], params["w2"], packed)
    y = jax.block_until_ready(y)

    # Pure-JAX reference (mirrors the PyTorch forward).
    h1 = jnp.maximum(x @ params["w1"] + params["b1"], 0.0)
    h2p = h1 @ params["w2"] + params["b2"]
    h2 = jnp.where(h2p >= 0.0, h2p, 0.01 * h2p)
    ref = jax.nn.sigmoid(h2 @ params["w3_row"].T + params["b3"])

    assert y.shape == (batch, 1)
    # Tolerance loosened slightly because the sigmoid denominator uses the
    # EUP's approximate reciprocal (pl.reciprocal(..., approx=True)).
    assert jnp.allclose(y, ref, atol=1e-3, rtol=1e-3), (y, ref)

    print("KERNEL_OK")
</pallas_src>

<mosaic_0001>
module attributes {stable_mosaic.version = 11 : i64} {
  func.func @mlp_kernel(%arg0: i32, %arg1: memref<8x16xf32, #tpu.memory_space<vmem>>, %arg2: memref<16x32xf32, #tpu.memory_space<vmem>>, %arg3: memref<32x32xf32, #tpu.memory_space<vmem>>, %arg4: memref<1x97xf32, #tpu.memory_space<vmem>>, %arg5: memref<8x1xf32, #tpu.memory_space<vmem>>) attributes {dimension_semantics = [#tpu.dimension_semantics<parallel>], iteration_bounds = array<i64: 1>, scalar_prefetch = 0 : i64, scratch_operands = 0 : i64, tpu.core_type = #tpu.core_type<tc>, window_params = [{transform_indices = @transform_0, window_bounds = array<i64: 8, 16>}, {pipeline_mode = #tpu.pipeline_mode<synchronous>, transform_indices = @transform_1, window_bounds = array<i64: 16, 32>}, {pipeline_mode = #tpu.pipeline_mode<synchronous>, transform_indices = @transform_2, window_bounds = array<i64: 32, 32>}, {pipeline_mode = #tpu.pipeline_mode<synchronous>, transform_indices = @transform_3, window_bounds = array<i64: 1, 97>}, {transform_indices = @transform_4, window_bounds = array<i64: 8, 1>}]} {
    %c0 = arith.constant 0 : index
    %c0_0 = arith.constant 0 : index
    %0 = vector.load %arg1[%c0, %c0_0] : memref<8x16xf32, #tpu.memory_space<vmem>>, vector<8x16xf32>
    %c0_1 = arith.constant 0 : index
    %c0_2 = arith.constant 0 : index
    %1 = vector.load %arg4[%c0_1, %c0_2] : memref<1x97xf32, #tpu.memory_space<vmem>>, vector<1x32xf32>
    %c0_3 = arith.constant 0 : index
    %c32 = arith.constant 32 : index
    %2 = vector.load %arg4[%c0_3, %c32] : memref<1x97xf32, #tpu.memory_space<vmem>>, vector<1x32xf32>
    %c0_4 = arith.constant 0 : index
    %c64 = arith.constant 64 : index
    %3 = vector.load %arg4[%c0_4, %c64] : memref<1x97xf32, #tpu.memory_space<vmem>>, vector<1x32xf32>
    %c0_5 = arith.constant 0 : index
    %c96 = arith.constant 96 : index
    %4 = vector.load %arg4[%c0_5, %c96] : memref<1x97xf32, #tpu.memory_space<vmem>>, vector<1x1xf32>
    %c0_6 = arith.constant 0 : index
    %c0_7 = arith.constant 0 : index
    %5 = vector.load %arg2[%c0_6, %c0_7] : memref<16x32xf32, #tpu.memory_space<vmem>>, vector<16x32xf32>
    %cst = arith.constant dense<0.000000e+00> : vector<8x32xf32>
    %6 = tpu.matmul %0, %5, %cst {dimension_numbers = #tpu.dot_dimension_numbers<[1], [0], [0], [1], [0, 0, 1, 1], [], []>} : vector<8x16xf32>, vector<16x32xf32>, vector<8x32xf32> -> vector<8x32xf32>
    %7 = vector.broadcast %2 : vector<1x32xf32> to vector<8x32xf32>
    %8 = arith.addf %6, %7 : vector<8x32xf32>
    %cst_8 = arith.constant 0.000000e+00 : f32
    %9 = vector.broadcast %cst_8 : f32 to vector<8x32xf32>
    %10 = arith.maximumf %8, %9 : vector<8x32xf32>
    %c0_9 = arith.constant 0 : index
    %c0_10 = arith.constant 0 : index
    %11 = vector.load %arg3[%c0_9, %c0_10] : memref<32x32xf32, #tpu.memory_space<vmem>>, vector<32x32xf32>
    %cst_11 = arith.constant dense<0.000000e+00> : vector<8x32xf32>
    %12 = tpu.matmul %10, %11, %cst_11 {dimension_numbers = #tpu.dot_dimension_numbers<[1], [0], [0], [1], [0, 0, 1, 1], [], []>} : vector<8x32xf32>, vector<32x32xf32>, vector<8x32xf32> -> vector<8x32xf32>
    %13 = vector.broadcast %3 : vector<1x32xf32> to vector<8x32xf32>
    %14 = arith.addf %12, %13 : vector<8x32xf32>
    %cst_12 = arith.constant 0.000000e+00 : f32
    %15 = vector.broadcast %cst_12 : f32 to vector<8x32xf32>
    %16 = arith.cmpf oge, %14, %15 : vector<8x32xf32>
    %cst_13 = arith.constant 0.00999999977 : f32
    %17 = vector.broadcast %cst_13 : f32 to vector<8x32xf32>
    %18 = arith.mulf %17, %14 : vector<8x32xf32>
    %19 = arith.select %16, %14, %18 : vector<8x32xi1>, vector<8x32xf32>
    %20 = vector.broadcast %1 : vector<1x32xf32> to vector<8x32xf32>
    %21 = arith.mulf %19, %20 : vector<8x32xf32>
    %cst_14 = arith.constant dense<0.000000e+00> : vector<8xf32>
    %22 = vector.multi_reduction <add>, %21, %cst_14 [1] : vector<8x32xf32> to vector<8xf32>
    %23 = vector.shape_cast %22 : vector<8xf32> to vector<8x1xf32>
    %24 = vector.broadcast %4 : vector<1x1xf32> to vector<8x1xf32>
    %25 = arith.addf %23, %24 : vector<8x1xf32>
    %cst_15 = arith.constant 0.000000e+00 : f32
    %26 = vector.broadcast %cst_15 : f32 to vector<8x1xf32>
    %27 = arith.subf %26, %25 : vector<8x1xf32>
    %28 = math.exp %27 : vector<8x1xf32>
    %cst_16 = arith.constant 1.000000e+00 : f32
    %29 = vector.broadcast %cst_16 : f32 to vector<8x1xf32>
    %30 = arith.addf %29, %28 : vector<8x1xf32>
    %31 = tpu.reciprocal %30 {approx = true} : vector<8x1xf32> -> vector<8x1xf32>
    %c0_17 = arith.constant 0 : index
    %c0_18 = arith.constant 0 : index
    %32 = vector.load %arg5[%c0_17, %c0_18] : memref<8x1xf32, #tpu.memory_space<vmem>>, vector<8x1xf32>
    tpu.vector_store %arg5[%c0_17, %c0_18], %31 {strides = array<i32>} : memref<8x1xf32, #tpu.memory_space<vmem>>, vector<8x1xf32>,
    return
  }
  func.func @transform_0(%arg0: i32) -> (i32, i32) {
    %c0_i32 = arith.constant 0 : i32
    %c0_i32_0 = arith.constant 0 : i32
    return %arg0, %c0_i32 : i32, i32
  }
  func.func @transform_1(%arg0: i32) -> (i32, i32) {
    %c0_i32 = arith.constant 0 : i32
    %c0_i32_0 = arith.constant 0 : i32
    %c0_i32_1 = arith.constant 0 : i32
    return %c0_i32, %c0_i32_0 : i32, i32
  }
  func.func @transform_2(%arg0: i32) -> (i32, i32) {
    %c0_i32 = arith.constant 0 : i32
    %c0_i32_0 = arith.constant 0 : i32
    %c0_i32_1 = arith.constant 0 : i32
    return %c0_i32, %c0_i32_0 : i32, i32
  }
  func.func @transform_3(%arg0: i32) -> (i32, i32) {
    %c0_i32 = arith.constant 0 : i32
    %c0_i32_0 = arith.constant 0 : i32
    %c0_i32_1 = arith.constant 0 : i32
    return %c0_i32, %c0_i32_0 : i32, i32
  }
  func.func @transform_4(%arg0: i32) -> (i32, i32) {
    %c0_i32 = arith.constant 0 : i32
    %c0_i32_0 = arith.constant 0 : i32
    return %arg0, %c0_i32 : i32, i32
  }
}

</mosaic_0001>

<llo_original>
// kernel: tpu_custom_call.1
$region0: #{tpu_custom_call.1}
  #allocation0 [shape = 'u32[]', space=smem, size = 0x4, offset = 0x4, fixed_abs, tag = 'smem constant byte address 0x4 - core index']
  #allocation1 [shape = 'u32[144,128]{1,0:T(1,128)}', space=vmem, size = 0x12000, scoped, tag = 'internal scratch']
  %s0 = inlined_call_operand.hbm [shape: f32[8,16], index: 0, kind: input, shape index: {}]
  %s1 = inlined_call_operand.hbm [shape: f32[16,32], index: 1, kind: input, shape index: {}]
  %s2 = inlined_call_operand.hbm [shape: f32[32,32], index: 2, kind: input, shape index: {}]
  %s3 = inlined_call_operand.vmem [shape: f32[1,97], index: 3, kind: input, shape index: {}]
  %s4 = inlined_call_operand.vmem [shape: f32[8,1], index: 4, kind: output, shape index: {}]
  %s5 = sld [smem:[#allocation0]]
  $region38: #{tpu_custom_call.1} parent=0
    _
  %s7 = ssub.s32 1, %s5
  %s8 = scalar_select 0, %s7, %s5
  $region1: #{tpu_custom_call.1} parent=0
    #allocation2 [shape = 'u8[4096]{0}', space=vmem, size = 0x1000, scoped, tag = 'input window, operand 0, single buffered']
    #allocation3 [shape = 's32[1]{0}', space=sflag, size = 0x4, scoped, tag = 'scoped memory for tpu_custom_call.1']
    #allocation4 [shape = 'u8[8192]{0}', space=vmem, size = 0x2000, scoped, tag = 'input window, operand 1, single buffered']
    #allocation5 [shape = 's32[1]{0}', space=sflag, size = 0x4, scoped, tag = 'scoped memory for tpu_custom_call.1']
    #allocation6 [shape = 'u8[16384]{0}', space=vmem, size = 0x4000, scoped, tag = 'input window, operand 2, single buffered']
    %9 = vsyncpa [#allocation3], 0
    %10 = vsyncpa [#allocation5], 0
    // Predicated region
    $region2: #{tpu_custom_call.1} parent=1 // pred_check
      _
    $region3: #{tpu_custom_call.1} parent=1 // pred_check_branch
      %12 = sbr.rel (0) target = $region5
    $region4: #{tpu_custom_call.1} parent=1 // pred_region
      %s14 = ssub.s32 128, 128
      %15 = vsyncadd [#allocation3], %s14
      %s17 = sshll.u32 [#allocation2], 4
      %s18 = int_to_ptr.vmem [resolvable:$true] %s17
      %20 = dma.hbm_to_vmem [thread:$0]  %s0, 128, %s18, [#allocation3]
    $region5: #{tpu_custom_call.1} parent=1 // pred_fallthru
      _
    // Predicated region
    $region6: #{tpu_custom_call.1} parent=1 // pred_check
      _
    $region7: #{tpu_custom_call.1} parent=1 // pred_check_branch
      %22 = sbr.rel (0) target = $region9
    $region8: #{tpu_custom_call.1} parent=1 // pred_region
      %s24 = ssub.s32 256, 256
      %25 = vsyncadd [#allocation5], %s24
      %s26 = sshll.u32 [#allocation4], 4
      %s27 = int_to_ptr.vmem [resolvable:$true] %s26
      %32 = dma.hbm_to_vmem [thread:$0]  %s1, 256, %s27, [#allocation5], 128, 128, 8
    $region9: #{tpu_custom_call.1} parent=1 // pred_fallthru
      _
    // Predicated region
    $region10: #{tpu_custom_call.1} parent=1 // pred_check
      _
    $region11: #{tpu_custom_call.1} parent=1 // pred_check_branch
      %34 = sbr.rel (0) target = $region13
    $region12: #{tpu_custom_call.1} parent=1 // pred_region
      %s36 = ssub.s32 512, 512
      %37 = vsyncadd [#allocation5], %s36
      %s38 = sshll.u32 [#allocation6], 4
      %s39 = int_to_ptr.vmem [resolvable:$true] %s38
      %44 = dma.hbm_to_vmem [thread:$0]  %s2, 512, %s39, [#allocation5], 128, 128, 8
    $region13: #{tpu_custom_call.1} parent=1 // pred_fallthru
      _
    // Predicated region
    $region14: #{tpu_custom_call.1} parent=1 // pred_check
      _
    $region15: #{tpu_custom_call.1} parent=1 // pred_check_branch
      %46 = sbr.rel (0) target = $region17
    $region16: #{tpu_custom_call.1} parent=1 // pred_region
      _
    $region17: #{tpu_custom_call.1} parent=1 // pred_fallthru
      _
    // Predicated region
    $region18: #{tpu_custom_call.1} parent=1 // pred_check
      _
    $region19: #{tpu_custom_call.1} parent=1 // pred_check_branch
      %48 = sbr.rel (0) target = $region21
    $region20: #{tpu_custom_call.1} parent=1 // pred_region
      %49 = dma.done [#allocation3], 128
    $region21: #{tpu_custom_call.1} parent=1 // pred_fallthru
      _
    // Predicated region
    $region22: #{tpu_custom_call.1} parent=1 // pred_check
      _
    $region23: #{tpu_custom_call.1} parent=1 // pred_check_branch
      %51 = sbr.rel (0) target = $region25
    $region24: #{tpu_custom_call.1} parent=1 // pred_region
      %52 = dma.done [#allocation5], 256
    $region25: #{tpu_custom_call.1} parent=1 // pred_fallthru
      _
    // Predicated region
    $region26: #{tpu_custom_call.1} parent=1 // pred_check
      _
    $region27: #{tpu_custom_call.1} parent=1 // pred_check_branch
      %54 = sbr.rel (0) target = $region29
    $region28: #{tpu_custom_call.1} parent=1 // pred_region
      %55 = dma.done [#allocation5], 512
    $region29: #{tpu_custom_call.1} parent=1 // pred_fallthru
      _
    %v56 = vld [vmem:[#allocation2] sm:$0xff]
    %v57 = vld [vmem:[%s3] sm:$0x1]
    %v58 = vld [vmem:[#allocation4] sm:$0xff]
    %v59 = vld [vmem:[#allocation4 + $0x8] sm:$0xff]
    %v61 = vlaneseq
    %v62 = vshrl.u32 %v61, 7
    %v63 = vsub.s32 0, %v62
    %v64 = vrot.slane %v57, %v63
    %65 = vrot.lane.b32.xlu0 %v64, 96
    %v66 = vpop.permute.xlu0 %65
    %vm68 = vcmask 130048
    %v70 = vsel %vm68, %v56, 0
    %72 = vmatprep.subr.mxu0 0.0
    %73 = vmatpush1.msra.mxu0 %v58
    %74 = vmatprep.subr.mxu0 0.0
    %75 = vmatpush1.msra.mxu0 %v59
    %76 = vmatprep.subr.mxu0 0.0
    %77 = vmatpush1.msra.mxu0 0.0
    %78 = vmatprep.subr.mxu0 0.0
    %79 = vmatpush1.msra.mxu0 0.0
    %80 = vmatprep.subr.mxu0 0.0
    %81 = vmatpush1.msra.mxu0 0.0
    %82 = vmatprep.subr.mxu0 0.0
    %83 = vmatpush1.msra.mxu0 0.0
    %84 = vmatprep.subr.mxu0 0.0
    %85 = vmatpush1.msra.mxu0 0.0
    %86 = vmatprep.subr.mxu0 0.0
    %87 = vmatpush1.msra.mxu0 0.0
    %88 = vmatprep.subr.mxu0 0.0
    %89 = vmatpush1.msra.mxu0 0.0
    %90 = vmatprep.subr.mxu0 0.0
    %91 = vmatpush1.msra.mxu0 0.0
    %92 = vmatprep.subr.mxu0 0.0
    %93 = vmatpush1.msra.mxu0 0.0
    %94 = vmatprep.subr.mxu0 0.0
    %95 = vmatpush1.msra.mxu0 0.0
    %96 = vmatprep.subr.mxu0 0.0
    %97 = vmatpush1.msra.mxu0 0.0
    %98 = vmatprep.subr.mxu0 0.0
    %99 = vmatpush1.msra.mxu0 0.0
    %100 = vmatprep.subr.mxu0 0.0
    %101 = vmatpush1.msra.mxu0 0.0
    %102 = vmatprep.subr.mxu0 0.0
    %103 = vmatpush1.msra.mxu0 0.0
    %104 = vmatprep.subr.mxu0 0.0
    %105 = vmatpush1.msra.mxu0 0.0
    %106 = vmatprep.subr.mxu0 0.0
    %107 = vmatpush1.msra.mxu0 0.0
    %108 = vmatprep.subr.mxu0 0.0
    %109 = vmatpush1.msra.mxu0 0.0
    %110 = vmatprep.subr.mxu0 0.0
    %111 = vmatpush1.msra.mxu0 0.0
    %112 = vmatprep.subr.mxu0 0.0
    %113 = vmatpush1.msra.mxu0 0.0
    %114 = vmatprep.subr.mxu0 0.0
    %115 = vmatpush1.msra.mxu0 0.0
    %116 = vmatprep.subr.mxu0 0.0
    %117 = vmatpush1.msra.mxu0 0.0
    %118 = vmatprep.subr.mxu0 0.0
    %119 = vmatpush1.msra.mxu0 0.0
    %120 = vmatprep.subr.mxu0 0.0
    %121 = vmatpush1.msra.mxu0 0.0
    %122 = vmatprep.subr.mxu0 0.0
    %123 = vmatpush1.msra.mxu0 0.0
    %124 = vmatprep.subr.mxu0 0.0
    %125 = vmatpush1.msra.mxu0 0.0
    %126 = vmatprep.subr.mxu0 0.0
    %127 = vmatpush1.msra.mxu0 0.0
    %128 = vmatprep.subr.mxu0 0.0
    %129 = vmatpush1.msra.mxu0 0.0
    %130 = vmatprep.subr.mxu0 0.0
    %131 = vmatpush1.msra.mxu0 0.0
    %132 = vmatprep.subr.mxu0 0.0
    %133 = vmatpush1.msra.mxu0 0.0
    %134 = vmatprep.subr.mxu0 0.0
    %135 = vmatpush1.msra.mxu0 0.0
    %136 = vmatprep.mubr.f32.mxu0 0.0
    %137 = vmatmul.mubr.f32.gmra.mrb[0].mxu0 %v70
    %v138 = vpop.f32.mrb[0].mxu0
    %v139 = vadd.f32 %v66, %v138
    %v140 = vpop.f32.mrb[0].mxu0
    %141 = vdwg.mxu0
    %v142 = vmax.f32 %v139, 0.0
    %v143 = vld [vmem:[#allocation6] sm:$0xff]
    %v144 = vld [vmem:[#allocation6 + $0x8] sm:$0xff]
    %v145 = vld [vmem:[#allocation6 + $0x10] sm:$0xff]
    %v146 = vld [vmem:[#allocation6 + $0x18] sm:$0xff]
    %147 = vrot.lane.b32.xlu0 %v64, 64
    %v148 = vpop.permute.xlu0 %147
    %vm150 = vcmask 261120
    %v152 = vsel %vm150, %v142, 0
    %154 = vmatprep.subr.mxu0 0.0
    %155 = vmatpush1.msra.mxu0 %v143
    %156 = vmatprep.subr.mxu0 0.0
    %157 = vmatpush1.msra.mxu0 %v144
    %158 = vmatprep.subr.mxu0 0.0
    %159 = vmatpush1.msra.mxu0 %v145
    %160 = vmatprep.subr.mxu0 0.0
    %161 = vmatpush1.msra.mxu0 %v146
    %162 = vmatprep.subr.mxu0 0.0
    %163 = vmatpush1.msra.mxu0 0.0
    %164 = vmatprep.subr.mxu0 0.0
    %165 = vmatpush1.msra.mxu0 0.0
    %166 = vmatprep.subr.mxu0 0.0
    %167 = vmatpush1.msra.mxu0 0.0
    %168 = vmatprep.subr.mxu0 0.0
    %169 = vmatpush1.msra.mxu0 0.0
    %170 = vmatprep.subr.mxu0 0.0
    %171 = vmatpush1.msra.mxu0 0.0
    %172 = vmatprep.subr.mxu0 0.0
    %173 = vmatpush1.msra.mxu0 0.0
    %174 = vmatprep.subr.mxu0 0.0
    %175 = vmatpush1.msra.mxu0 0.0
    %176 = vmatprep.subr.mxu0 0.0
    %177 = vmatpush1.msra.mxu0 0.0
    %178 = vmatprep.subr.mxu0 0.0
    %179 = vmatpush1.msra.mxu0 0.0
    %180 = vmatprep.subr.mxu0 0.0
    %181 = vmatpush1.msra.mxu0 0.0
    %182 = vmatprep.subr.mxu0 0.0
    %183 = vmatpush1.msra.mxu0 0.0
    %184 = vmatprep.subr.mxu0 0.0
    %185 = vmatpush1.msra.mxu0 0.0
    %186 = vmatprep.subr.mxu0 0.0
    %187 = vmatpush1.msra.mxu0 0.0
    %188 = vmatprep.subr.mxu0 0.0
    %189 = vmatpush1.msra.mxu0 0.0
    %190 = vmatprep.subr.mxu0 0.0
    %191 = vmatpush1.msra.mxu0 0.0
    %192 = vmatprep.subr.mxu0 0.0
    %193 = vmatpush1.msra.mxu0 0.0
    %194 = vmatprep.subr.mxu0 0.0
    %195 = vmatpush1.msra.mxu0 0.0
    %196 = vmatprep.subr.mxu0 0.0
    %197 = vmatpush1.msra.mxu0 0.0
    %198 = vmatprep.subr.mxu0 0.0
    %199 = vmatpush1.msra.mxu0 0.0
    %200 = vmatprep.subr.mxu0 0.0
    %201 = vmatpush1.msra.mxu0 0.0
    %202 = vmatprep.subr.mxu0 0.0
    %203 = vmatpush1.msra.mxu0 0.0
    %204 = vmatprep.subr.mxu0 0.0
    %205 = vmatpush1.msra.mxu0 0.0
    %206 = vmatprep.subr.mxu0 0.0
    %207 = vmatpush1.msra.mxu0 0.0
    %208 = vmatprep.subr.mxu0 0.0
    %209 = vmatpush1.msra.mxu0 0.0
    %210 = vmatprep.subr.mxu0 0.0
    %211 = vmatpush1.msra.mxu0 0.0
    %212 = vmatprep.subr.mxu0 0.0
    %213 = vmatpush1.msra.mxu0 0.0
    %214 = vmatprep.subr.mxu0 0.0
    %215 = vmatpush1.msra.mxu0 0.0
    %216 = vmatprep.subr.mxu0 0.0
    %217 = vmatpush1.msra.mxu0 0.0
    %218 = vmatprep.mubr.f32.mxu0 0.0
    %219 = vmatmul.mubr.f32.gmra.mrb[0].mxu0 %v152
    %v220 = vpop.f32.mrb[0].mxu0
    %v221 = vadd.f32 %v148, %v220
    %v222 = vpop.f32.mrb[0].mxu0
    %223 = vdwg.mxu0
    %vm224 = vcmp.ge.f32.partialorder %v221, 0.0
    %v225 = vmul.f32 %v221, 0.01
    %v226 = vsel %vm224, %v221, %v225
    %v228 = vmul.f32 %v226, %v64
    %v229 = vsel %vm150, %v228, 0.0
    %230 = vadd.xlane.f32.xlu0 %v229
    %v231 = vpop.xlane.xlu0 %230
    %v232 = vadd.f32 %v231, %v64
    %v233 = vsub.f32 0.0, %v232
    %v234 = vmul.f32 %v233, 1.442695
    %v235 = vpow.pop %v234
    %v236 = vadd.f32 %v235, 1.0
    %v237 = vrcp.pop %v236
    %239 = vrot.lane.b32.xlu0 %v237, 32
    %v240 = vpop.permute.xlu0 %239
    %vm242 = vcmask 7168
    %243 = vst.msk [vmem:[%s4] sm:$0xff] %vm242, %v240
    // Predicated region
    $region30: #{tpu_custom_call.1} parent=1 // pred_check
      _
    $region31: #{tpu_custom_call.1} parent=1 // pred_check_branch
      %245 = sbr.rel (0) target = $region33
    $region32: #{tpu_custom_call.1} parent=1 // pred_region
      _
    $region33: #{tpu_custom_call.1} parent=1 // pred_fallthru
      _
    // Predicated region
    $region34: #{tpu_custom_call.1} parent=1 // pred_check
      _
    $region35: #{tpu_custom_call.1} parent=1 // pred_check_branch
      %247 = sbr.rel (0) target = $region37
    $region36: #{tpu_custom_call.1} parent=1 // pred_region
      _
    $region37: #{tpu_custom_call.1} parent=1 // pred_fallthru
      _
    %248 = vsyncpa [#allocation3], 1
    %249 = vsyncpa [#allocation5], 1

</llo_original>
